<compile_context>
chip_gen: v5e
topology: v5e:2x2
jax: 0.10.0
libtpu: 0.0.40
codegen_flags: <defaults>
</compile_context>

<pallas_src>
import jax
import jax.numpy as jnp
from jax.experimental import pallas as pl
from jax.experimental.pallas import tpu as pltpu


def _gcn_fused_kernel(a_ref, x_ref, w1_ref, b1_ref, w2_ref, b2_ref,
                      w3_ref, b3_ref, o_ref):
    # a_ref : (N, N)      bf16 normalized adjacency, VMEM-resident
    # x_ref : (N, Fin)    bf16 node features
    # wK    : bf16 weights (in, out), out-dims zero-padded to 128 lanes
    # bK    : f32  biases (1, out_pad)
    # o_ref : (N, C_pad)  f32 logits (lane-dense)
    bf16 = jnp.bfloat16
    A = a_ref[...]

    # --- layer 1: relu( A @ (X @ W1) + b1 ) -------------------------------
    h = jnp.dot(x_ref[...], w1_ref[...], preferred_element_type=jnp.float32)
    h = jnp.dot(A, h.astype(bf16), preferred_element_type=jnp.float32)
    h = jnp.maximum(h + b1_ref[...], 0.0)

    # --- layer 2: relu( A @ (h @ W2) + b2 ) -------------------------------
    h = jnp.dot(h.astype(bf16), w2_ref[...], preferred_element_type=jnp.float32)
    h = jnp.dot(A, h.astype(bf16), preferred_element_type=jnp.float32)
    h = jnp.maximum(h + b2_ref[...], 0.0)

    # --- layer 3: A @ (h @ W3) + b3  (no relu, lane-dense f32 store) -------
    h = jnp.dot(h.astype(bf16), w3_ref[...], preferred_element_type=jnp.float32)
    o_ref[...] = (jnp.dot(A, h.astype(bf16), preferred_element_type=jnp.float32)
                  + b3_ref[...]).astype(o_ref.dtype)


def gcn_forward(X, A_hat, params, *, num_classes):
    """Fused GCN forward.

    Returns lane-padded logits of shape (N, C_pad) with C_pad = roundup(num_classes, 128);
    columns >= num_classes are exactly zero. Slice at the consumer.
    """
    (W1, b1), (W2, b2), (W3, b3) = params
    N, Fin = X.shape
    H = W1.shape[1]
    C = W3.shape[1]
    assert C == num_classes

    lane = 128
    H_pad = ((H + lane - 1) // lane) * lane
    C_pad = ((C + lane - 1) // lane) * lane

    bf16 = jnp.bfloat16
    A_bf = A_hat.astype(bf16)
    X_bf = X.astype(bf16)

    # Zero-padded, lane-dense weights (bf16) and biases (f32). Padded columns
    # of every intermediate stay exactly zero through bias-add + ReLU.
    W1p = jnp.zeros((Fin, H_pad), bf16).at[:, :H].set(W1.astype(bf16))
    W2p = jnp.zeros((H_pad, H_pad), bf16).at[:H, :H].set(W2.astype(bf16))
    W3p = jnp.zeros((H_pad, C_pad), bf16).at[:H, :C].set(W3.astype(bf16))
    b1p = jnp.zeros((1, H_pad), jnp.float32).at[:, :H].set(b1.reshape(1, H))
    b2p = jnp.zeros((1, H_pad), jnp.float32).at[:, :H].set(b2.reshape(1, H))
    b3p = jnp.zeros((1, C_pad), jnp.float32).at[:, :C].set(b3.reshape(1, C))

    # Size the scoped-VMEM limit to the actual resident buffers + headroom
    # (default 16/32 MiB caps N long before physical VMEM would).
    operands = (A_bf, X_bf, W1p, b1p, W2p, b2p, W3p, b3p)
    resident = sum(a.size * a.dtype.itemsize for a in operands)
    resident += N * C_pad * 4          # f32 output
    resident += 3 * N * H_pad * 4      # f32 intermediates / spill headroom
    vmem_limit = min(max(2 * resident + (2 << 20), 32 << 20), 64 << 20)

    vmem_spec = lambda: pl.BlockSpec(memory_space=pltpu.MemorySpace.VMEM)

    out_pad = pl.pallas_call(
        _gcn_fused_kernel,
        out_shape=jax.ShapeDtypeStruct((N, C_pad), jnp.float32),
        in_specs=[vmem_spec() for _ in range(len(operands))],
        out_specs=vmem_spec(),
        compiler_params=pltpu.CompilerParams(vmem_limit_bytes=vmem_limit),
    )(*operands)

    return out_pad


def init_params(key, input_dim, hidden_dim, num_classes):
    """Deterministic synthetic init of the 3 Linear layers (W stored as (in, out))."""
    ks = jax.random.split(key, 6)

    def lin(kw, kb, fin, fout):
        bound = 1.0 / jnp.sqrt(fin)
        W = jax.random.uniform(kw, (fin, fout), jnp.float32, -bound, bound)
        b = jax.random.uniform(kb, (fout,), jnp.float32, -bound, bound)
        return W, b

    W1, b1 = lin(ks[0], ks[1], input_dim, hidden_dim)
    W2, b2 = lin(ks[2], ks[3], hidden_dim, hidden_dim)
    W3, b3 = lin(ks[4], ks[5], hidden_dim, num_classes)
    return (W1, b1), (W2, b2), (W3, b3)


if __name__ == "__main__":
    key = jax.random.PRNGKey(0)
    N = 64            # number of graph nodes
    input_dim = 32
    hidden_dim = 32   # matches Method_GCN_Classification.hidden_dim
    num_classes = 8

    k_x, k_a, k_p = jax.random.split(key, 3)
    X = jax.random.normal(k_x, (N, input_dim), jnp.float32)

    # Symmetric normalized adjacency A_hat = D^-1/2 (A + I) D^-1/2.
    raw = jax.random.uniform(k_a, (N, N), jnp.float32)
    A = (raw > 0.9).astype(jnp.float32)
    A = jnp.maximum(A, A.T) + jnp.eye(N, dtype=jnp.float32)
    deg = jnp.sum(A, axis=1)
    d_inv_sqrt = 1.0 / jnp.sqrt(deg)
    A_hat = A * d_inv_sqrt[:, None] * d_inv_sqrt[None, :]

    params = init_params(k_p, input_dim, hidden_dim, num_classes)

    logits_pad = gcn_forward(X, A_hat, params, num_classes=num_classes)
    jax.block_until_ready(logits_pad)
    logits = logits_pad[:, :num_classes]   # slice at the consumer

    (W1, b1), (W2, b2), (W3, b3) = params

    # Reference 1: mirrors the kernel's bf16-operand / f32-accumulate MXU path.
    bf16 = jnp.bfloat16
    A_bf = A_hat.astype(bf16)

    def bdot(a, b):
        return jnp.dot(a.astype(bf16), b.astype(bf16),
                       preferred_element_type=jnp.float32)

    h = jnp.maximum(bdot(A_bf, bdot(X, W1)) + b1, 0.0)
    h = jnp.maximum(bdot(A_bf, bdot(h, W2)) + b2, 0.0)
    ref_bf16 = bdot(A_bf, bdot(h, W3)) + b3

    # Reference 2: pure-f32 module semantics (looser tolerance: bf16 MXU operands).
    h = jnp.maximum(A_hat @ X @ W1 + b1, 0.0)
    h = jnp.maximum(A_hat @ h @ W2 + b2, 0.0)
    ref_f32 = A_hat @ h @ W3 + b3

    assert logits.shape == (N, num_classes)
    assert jnp.allclose(logits, ref_bf16, atol=1e-2, rtol=1e-2)
    assert jnp.allclose(logits, ref_f32, atol=5e-2, rtol=5e-2)

    print("KERNEL_OK")
</pallas_src>

<mosaic_0001>
module attributes {stable_mosaic.version = 11 : i64} {
  func.func @_gcn_fused_kernel(%arg0: memref<64x64xbf16, #tpu.memory_space<vmem>>, %arg1: memref<64x32xbf16, #tpu.memory_space<vmem>>, %arg2: memref<32x128xbf16, #tpu.memory_space<vmem>>, %arg3: memref<1x128xf32, #tpu.memory_space<vmem>>, %arg4: memref<128x128xbf16, #tpu.memory_space<vmem>>, %arg5: memref<1x128xf32, #tpu.memory_space<vmem>>, %arg6: memref<128x128xbf16, #tpu.memory_space<vmem>>, %arg7: memref<1x128xf32, #tpu.memory_space<vmem>>, %arg8: memref<64x128xf32, #tpu.memory_space<vmem>>) attributes {dimension_semantics = [], scalar_prefetch = 0 : i64, scratch_operands = 0 : i64, tpu.core_type = #tpu.core_type<tc>} {
    %c0 = arith.constant 0 : index
    %c0_0 = arith.constant 0 : index
    %0 = vector.load %arg0[%c0, %c0_0] : memref<64x64xbf16, #tpu.memory_space<vmem>>, vector<64x64xbf16>
    %c0_1 = arith.constant 0 : index
    %c0_2 = arith.constant 0 : index
    %1 = vector.load %arg1[%c0_1, %c0_2] : memref<64x32xbf16, #tpu.memory_space<vmem>>, vector<64x32xbf16>
    %c0_3 = arith.constant 0 : index
    %c0_4 = arith.constant 0 : index
    %2 = vector.load %arg2[%c0_3, %c0_4] : memref<32x128xbf16, #tpu.memory_space<vmem>>, vector<32x128xbf16>
    %cst = arith.constant dense<0.000000e+00> : vector<64x128xf32>
    %3 = tpu.matmul %1, %2, %cst {dimension_numbers = #tpu.dot_dimension_numbers<[1], [0], [0], [1], [0, 0, 1, 1], [], []>} : vector<64x32xbf16>, vector<32x128xbf16>, vector<64x128xf32> -> vector<64x128xf32>
    %4 = arith.truncf %3 : vector<64x128xf32> to vector<64x128xbf16>
    %cst_5 = arith.constant dense<0.000000e+00> : vector<64x128xf32>
    %5 = tpu.matmul %0, %4, %cst_5 {dimension_numbers = #tpu.dot_dimension_numbers<[1], [0], [0], [1], [0, 0, 1, 1], [], []>} : vector<64x64xbf16>, vector<64x128xbf16>, vector<64x128xf32> -> vector<64x128xf32>
    %c0_6 = arith.constant 0 : index
    %c0_7 = arith.constant 0 : index
    %6 = vector.load %arg3[%c0_6, %c0_7] : memref<1x128xf32, #tpu.memory_space<vmem>>, vector<1x128xf32>
    %7 = vector.broadcast %6 : vector<1x128xf32> to vector<64x128xf32>
    %8 = arith.addf %5, %7 : vector<64x128xf32>
    %cst_8 = arith.constant 0.000000e+00 : f32
    %9 = vector.broadcast %cst_8 : f32 to vector<64x128xf32>
    %10 = arith.maximumf %8, %9 : vector<64x128xf32>
    %11 = arith.truncf %10 : vector<64x128xf32> to vector<64x128xbf16>
    %c0_9 = arith.constant 0 : index
    %c0_10 = arith.constant 0 : index
    %12 = vector.load %arg4[%c0_9, %c0_10] : memref<128x128xbf16, #tpu.memory_space<vmem>>, vector<128x128xbf16>
    %cst_11 = arith.constant dense<0.000000e+00> : vector<64x128xf32>
    %13 = tpu.matmul %11, %12, %cst_11 {dimension_numbers = #tpu.dot_dimension_numbers<[1], [0], [0], [1], [0, 0, 1, 1], [], []>} : vector<64x128xbf16>, vector<128x128xbf16>, vector<64x128xf32> -> vector<64x128xf32>
    %14 = arith.truncf %13 : vector<64x128xf32> to vector<64x128xbf16>
    %cst_12 = arith.constant dense<0.000000e+00> : vector<64x128xf32>
    %15 = tpu.matmul %0, %14, %cst_12 {dimension_numbers = #tpu.dot_dimension_numbers<[1], [0], [0], [1], [0, 0, 1, 1], [], []>} : vector<64x64xbf16>, vector<64x128xbf16>, vector<64x128xf32> -> vector<64x128xf32>
    %c0_13 = arith.constant 0 : index
    %c0_14 = arith.constant 0 : index
    %16 = vector.load %arg5[%c0_13, %c0_14] : memref<1x128xf32, #tpu.memory_space<vmem>>, vector<1x128xf32>
    %17 = vector.broadcast %16 : vector<1x128xf32> to vector<64x128xf32>
    %18 = arith.addf %15, %17 : vector<64x128xf32>
    %cst_15 = arith.constant 0.000000e+00 : f32
    %19 = vector.broadcast %cst_15 : f32 to vector<64x128xf32>
    %20 = arith.maximumf %18, %19 : vector<64x128xf32>
    %21 = arith.truncf %20 : vector<64x128xf32> to vector<64x128xbf16>
    %c0_16 = arith.constant 0 : index
    %c0_17 = arith.constant 0 : index
    %22 = vector.load %arg6[%c0_16, %c0_17] : memref<128x128xbf16, #tpu.memory_space<vmem>>, vector<128x128xbf16>
    %cst_18 = arith.constant dense<0.000000e+00> : vector<64x128xf32>
    %23 = tpu.matmul %21, %22, %cst_18 {dimension_numbers = #tpu.dot_dimension_numbers<[1], [0], [0], [1], [0, 0, 1, 1], [], []>} : vector<64x128xbf16>, vector<128x128xbf16>, vector<64x128xf32> -> vector<64x128xf32>
    %24 = arith.truncf %23 : vector<64x128xf32> to vector<64x128xbf16>
    %cst_19 = arith.constant dense<0.000000e+00> : vector<64x128xf32>
    %25 = tpu.matmul %0, %24, %cst_19 {dimension_numbers = #tpu.dot_dimension_numbers<[1], [0], [0], [1], [0, 0, 1, 1], [], []>} : vector<64x64xbf16>, vector<64x128xbf16>, vector<64x128xf32> -> vector<64x128xf32>
    %c0_20 = arith.constant 0 : index
    %c0_21 = arith.constant 0 : index
    %26 = vector.load %arg7[%c0_20, %c0_21] : memref<1x128xf32, #tpu.memory_space<vmem>>, vector<1x128xf32>
    %27 = vector.broadcast %26 : vector<1x128xf32> to vector<64x128xf32>
    %28 = arith.addf %25, %27 : vector<64x128xf32>
    %c0_22 = arith.constant 0 : index
    %c0_23 = arith.constant 0 : index
    %29 = vector.load %arg8[%c0_22, %c0_23] : memref<64x128xf32, #tpu.memory_space<vmem>>, vector<64x128xf32>
    tpu.vector_store %arg8[%c0_22, %c0_23], %28 {strides = array<i32>} : memref<64x128xf32, #tpu.memory_space<vmem>>, vector<64x128xf32>,
    return
  }
}

</mosaic_0001>

<llo_original>
// kernel: tpu_custom_call.1
$region0: #{tpu_custom_call.1}
  #allocation0 [shape = 'u32[]', space=smem, size = 0x4, offset = 0x4, fixed_abs, tag = 'smem constant byte address 0x4 - core index']
  #allocation1 [shape = 'u32[72,128]{1,0:T(1,128)}', space=vmem, size = 0x9000, scoped, tag = 'internal scratch']
  %s0 = inlined_call_operand.vmem [shape: bf16[64,64], index: 0, kind: input, shape index: {}]
  %s1 = inlined_call_operand.vmem [shape: bf16[64,32], index: 1, kind: input, shape index: {}]
  %s2 = inlined_call_operand.vmem [shape: bf16[32,128], index: 2, kind: input, shape index: {}]
  %s3 = inlined_call_operand.vmem [shape: f32[1,128], index: 3, kind: input, shape index: {}]
  %s4 = inlined_call_operand.hbm [shape: bf16[128,128], index: 4, kind: input, shape index: {}]
  %s5 = inlined_call_operand.vmem [shape: f32[1,128], index: 5, kind: input, shape index: {}]
  %s6 = inlined_call_operand.hbm [shape: bf16[128,128], index: 6, kind: input, shape index: {}]
  %s7 = inlined_call_operand.vmem [shape: f32[1,128], index: 7, kind: input, shape index: {}]
  %s8 = inlined_call_operand.hbm [shape: f32[64,128], index: 8, kind: output, shape index: {}]
  %s9 = sld [smem:[#allocation0]]
  $region50: #{tpu_custom_call.1} parent=0
    _
  %s11 = ssub.s32 1, %s9
  %s12 = scalar_select 0, %s11, %s9
  $region1: #{tpu_custom_call.1} parent=0
    #allocation2 [shape = 'u8[32768]{0}', space=vmem, size = 0x8000, scoped, tag = 'input window, operand 4, single buffered']
    #allocation3 [shape = 's32[1]{0}', space=sflag, size = 0x4, scoped, tag = 'scoped memory for tpu_custom_call.1']
    #allocation4 [shape = 's32[1]{0}', space=sflag, size = 0x4, scoped, tag = 'scoped memory for tpu_custom_call.1']
    #allocation5 [shape = 'u8[32768]{0}', space=vmem, size = 0x8000, scoped, tag = 'input window, operand 6, single buffered']
    #allocation6 [shape = 's32[1]{0}', space=sflag, size = 0x4, scoped, tag = 'scoped memory for tpu_custom_call.1']
    #allocation7 [shape = 'u8[32768]{0}', space=vmem, size = 0x8000, scoped, tag = 'output window, operand 0, single buffered']
    %13 = vsyncpa [#allocation3], 0
    %14 = vsyncpa [#allocation6], 0
    %15 = vsyncpa [#allocation4], 0
    // Predicated region
    $region2: #{tpu_custom_call.1} parent=1 // pred_check
      _
    $region3: #{tpu_custom_call.1} parent=1 // pred_check_branch
      %17 = sbr.rel (0) target = $region5
    $region4: #{tpu_custom_call.1} parent=1 // pred_region
      _
    $region5: #{tpu_custom_call.1} parent=1 // pred_fallthru
      _
    // Predicated region
    $region6: #{tpu_custom_call.1} parent=1 // pred_check
      _
    $region7: #{tpu_custom_call.1} parent=1 // pred_check_branch
      %19 = sbr.rel (0) target = $region9
    $region8: #{tpu_custom_call.1} parent=1 // pred_region
      _
    $region9: #{tpu_custom_call.1} parent=1 // pred_fallthru
      _
    // Predicated region
    $region10: #{tpu_custom_call.1} parent=1 // pred_check
      _
    $region11: #{tpu_custom_call.1} parent=1 // pred_check_branch
      %21 = sbr.rel (0) target = $region13
    $region12: #{tpu_custom_call.1} parent=1 // pred_region
      _
    $region13: #{tpu_custom_call.1} parent=1 // pred_fallthru
      _
    // Predicated region
    $region14: #{tpu_custom_call.1} parent=1 // pred_check
      _
    $region15: #{tpu_custom_call.1} parent=1 // pred_check_branch
      %23 = sbr.rel (0) target = $region17
    $region16: #{tpu_custom_call.1} parent=1 // pred_region
      _
    $region17: #{tpu_custom_call.1} parent=1 // pred_fallthru
      _
    // Predicated region
    $region18: #{tpu_custom_call.1} parent=1 // pred_check
      _
    $region19: #{tpu_custom_call.1} parent=1 // pred_check_branch
      %25 = sbr.rel (0) target = $region21
    $region20: #{tpu_custom_call.1} parent=1 // pred_region
      %27 = vsyncadd [#allocation3], 0
      %s28 = sshll.u32 %s4, 4
      %s29 = int_to_ptr.hbm [resolvable:$true] %s28
      %s30 = sshll.u32 [#allocation2], 4
      %s31 = int_to_ptr.vmem [resolvable:$true] %s30
      %36 = dma.hbm_to_vmem [thread:$0]  %s29, 1024, %s31, [#allocation3], 64, 64, 4
    $region21: #{tpu_custom_call.1} parent=1 // pred_fallthru
      _
    // Predicated region
    $region22: #{tpu_custom_call.1} parent=1 // pred_check
      _
    $region23: #{tpu_custom_call.1} parent=1 // pred_check_branch
      %38 = sbr.rel (0) target = $region25
    $region24: #{tpu_custom_call.1} parent=1 // pred_region
      _
    $region25: #{tpu_custom_call.1} parent=1 // pred_fallthru
      _
    // Predicated region
    $region26: #{tpu_custom_call.1} parent=1 // pred_check
      _
    $region27: #{tpu_custom_call.1} parent=1 // pred_check_branch
      %40 = sbr.rel (0) target = $region29
    $region28: #{tpu_custom_call.1} parent=1 // pred_region
      %42 = vsyncadd [#allocation6], 0
      %s43 = sshll.u32 %s6, 4
      %s44 = int_to_ptr.hbm [resolvable:$true] %s43
      %s45 = sshll.u32 [#allocation5], 4
      %s46 = int_to_ptr.vmem [resolvable:$true] %s45
      %51 = dma.hbm_to_vmem [thread:$0]  %s44, 1024, %s46, [#allocation6], 64, 64, 4
    $region29: #{tpu_custom_call.1} parent=1 // pred_fallthru
      _
    // Predicated region
    $region30: #{tpu_custom_call.1} parent=1 // pred_check
      _
    $region31: #{tpu_custom_call.1} parent=1 // pred_check_branch
      %53 = sbr.rel (0) target = $region33
    $region32: #{tpu_custom_call.1} parent=1 // pred_region
      _
    $region33: #{tpu_custom_call.1} parent=1 // pred_fallthru
      _
    // Predicated region
    $region34: #{tpu_custom_call.1} parent=1 // pred_check
      _
    $region35: #{tpu_custom_call.1} parent=1 // pred_check_branch
      %55 = sbr.rel (0) target = $region37
    $region36: #{tpu_custom_call.1} parent=1 // pred_region
      %57 = dma.done [#allocation3], 1024
    $region37: #{tpu_custom_call.1} parent=1 // pred_fallthru
      _
    // Predicated region
    $region38: #{tpu_custom_call.1} parent=1 // pred_check
      _
    $region39: #{tpu_custom_call.1} parent=1 // pred_check_branch
      %59 = sbr.rel (0) target = $region41
    $region40: #{tpu_custom_call.1} parent=1 // pred_region
      %61 = dma.done [#allocation6], 1024
    $region41: #{tpu_custom_call.1} parent=1 // pred_fallthru
      _
    %v63 = vld [vmem:[%s0] sm:$0xf]
    %v64 = vld [vmem:[%s0 + $0x4] sm:$0xf]
    %v65 = vld [vmem:[%s0 + $0x8] sm:$0xf]
    %v66 = vld [vmem:[%s0 + $0xc] sm:$0xf]
    %v67 = vld [vmem:[%s0 + $0x10] sm:$0xf]
    %v68 = vld [vmem:[%s0 + $0x14] sm:$0xf]
    %v69 = vld [vmem:[%s0 + $0x18] sm:$0xf]
    %v70 = vld [vmem:[%s0 + $0x1c] sm:$0xf]
    %v71 = vld [vmem:[%s1] sm:$0xf]
    %v72 = vld [vmem:[%s1 + $0x4] sm:$0xf]
    %v73 = vld [vmem:[%s1 + $0x8] sm:$0xf]
    %v74 = vld [vmem:[%s1 + $0xc] sm:$0xf]
    %v75 = vld [vmem:[%s1 + $0x10] sm:$0xf]
    %v76 = vld [vmem:[%s1 + $0x14] sm:$0xf]
    %v77 = vld [vmem:[%s1 + $0x18] sm:$0xf]
    %v78 = vld [vmem:[%s1 + $0x1c] sm:$0xf]
    %v79 = vld [vmem:[%s2] sm:$0xf]
    %v80 = vld [vmem:[%s2 + $0x4] sm:$0xf]
    %v81 = vld [vmem:[%s2 + $0x8] sm:$0xf]
    %v82 = vld [vmem:[%s2 + $0xc] sm:$0xf]
    %v91 = vunpack.c.l.b16 %v71
    %v92 = vunpack.c.l.b16 %v72
    %v93 = vunpack.c.l.b16 %v73
    %v94 = vunpack.c.l.b16 %v74
    %v95 = vunpack.c.l.b16 %v75
    %v96 = vunpack.c.l.b16 %v76
    %v97 = vunpack.c.l.b16 %v77
    %v98 = vunpack.c.l.b16 %v78
    %v99 = vpack.c.b16 %v92, %v91
    %v100 = vpack.c.b16 %v94, %v93
    %v101 = vpack.c.b16 %v96, %v95
    %v102 = vpack.c.b16 %v98, %v97
    %v107 = vunpack.c.l.b16 %v79
    %v108 = vunpack.c.l.b16 %v80
    %v109 = vunpack.c.l.b16 %v81
    %v110 = vunpack.c.l.b16 %v82
    %v111 = vpack.c.b16 %v108, %v107
    %v112 = vpack.c.b16 %v110, %v109
    %vm115 = vcmask 261120
    %v117 = vsel %vm115, %v99, 0
    %v120 = vsel %vm115, %v100, 0
    %v123 = vsel %vm115, %v101, 0
    %v126 = vsel %vm115, %v102, 0
    %128 = vmatpush.bf16.msra.mxu0 0
    %129 = vmatpush.bf16.msra.mxu0 0
    %130 = vmatpush.bf16.msra.mxu0 0
    %131 = vmatpush.bf16.msra.mxu0 0
    %132 = vmatpush.bf16.msra.mxu0 0
    %133 = vmatpush.bf16.msra.mxu0 0
    %134 = vmatpush.bf16.msra.mxu0 %v112
    %135 = vmatpush.bf16.msra.mxu0 %v111
    %136 = vmatmul.bf16.gmra.mxu0 %v117
    %v137 = vpop.f32.mrf.mxu0
    %v138 = vadd.f32 0.0, %v137
    %v139 = vpop.f32.mrf.mxu0
    %v140 = vadd.f32 0.0, %v139
    %141 = vmatmul.bf16.gmra.mxu0 %v120
    %v142 = vpop.f32.mrf.mxu0
    %v143 = vadd.f32 0.0, %v142
    %v144 = vpop.f32.mrf.mxu0
    %v145 = vadd.f32 0.0, %v144
    %146 = vmatmul.bf16.gmra.mxu0 %v123
    %v147 = vpop.f32.mrf.mxu0
    %v148 = vadd.f32 0.0, %v147
    %v149 = vpop.f32.mrf.mxu0
    %v150 = vadd.f32 0.0, %v149
    %151 = vmatmul.bf16.gmra.mxu0 %v126
    %v152 = vpop.f32.mrf.mxu0
    %v153 = vadd.f32 0.0, %v152
    %v154 = vpop.f32.mrf.mxu0
    %v155 = vadd.f32 0.0, %v154
    %156 = vdwg.mxu0
    %v157 = vpack.c.bf16 %v140, %v138
    %v158 = vpack.c.bf16 %v145, %v143
    %v159 = vpack.c.bf16 %v150, %v148
    %v160 = vpack.c.bf16 %v155, %v153
    %v161 = vld [vmem:[%s3] sm:$0x1]
    %v163 = vperm.slane %v161, 0
    %v173 = vunpack.c.l.b16 %v63
    %v174 = vunpack.c.l.b16 %v64
    %v175 = vunpack.c.l.b16 %v65
    %v176 = vunpack.c.l.b16 %v66
    %v177 = vunpack.c.l.b16 %v67
    %v178 = vunpack.c.l.b16 %v68
    %v179 = vunpack.c.l.b16 %v69
    %v180 = vunpack.c.l.b16 %v70
    %v181 = vpack.c.b16 %v174, %v173
    %v182 = vpack.c.b16 %v176, %v175
    %v183 = vpack.c.b16 %v178, %v177
    %v184 = vpack.c.b16 %v180, %v179
    %vm185 = vcmask 523264
    %v187 = vsel %vm185, %v181, 0
    %v190 = vsel %vm185, %v182, 0
    %v193 = vsel %vm185, %v183, 0
    %v196 = vsel %vm185, %v184, 0
    %198 = vmatpush.bf16.msra.mxu0 0
    %199 = vmatpush.bf16.msra.mxu0 0
    %200 = vmatpush.bf16.msra.mxu0 0
    %201 = vmatpush.bf16.msra.mxu0 0
    %202 = vmatpush.bf16.msra.mxu0 %v160
    %203 = vmatpush.bf16.msra.mxu0 %v159
    %204 = vmatpush.bf16.msra.mxu0 %v158
    %205 = vmatpush.bf16.msra.mxu0 %v157
    %206 = vmatmul.bf16.gmra.mxu0 %v187
    %v207 = vpop.f32.mrf.mxu0
    %v208 = vadd.f32 %v163, %v207
    %v209 = vpop.f32.mrf.mxu0
    %v210 = vadd.f32 %v163, %v209
    %211 = vmatmul.bf16.gmra.mxu0 %v190
    %v212 = vpop.f32.mrf.mxu0
    %v213 = vadd.f32 %v163, %v212
    %v214 = vpop.f32.mrf.mxu0
    %v215 = vadd.f32 %v163, %v214
    %216 = vmatmul.bf16.gmra.mxu0 %v193
    %v217 = vpop.f32.mrf.mxu0
    %v218 = vadd.f32 %v163, %v217
    %v219 = vpop.f32.mrf.mxu0
    %v220 = vadd.f32 %v163, %v219
    %221 = vmatmul.bf16.gmra.mxu0 %v196
    %v222 = vpop.f32.mrf.mxu0
    %v223 = vadd.f32 %v163, %v222
    %v224 = vpop.f32.mrf.mxu0
    %v225 = vadd.f32 %v163, %v224
    %226 = vdwg.mxu0
    %v227 = vmax.f32 %v208, 0.0
    %v228 = vmax.f32 %v210, 0.0
    %v229 = vmax.f32 %v213, 0.0
    %v230 = vmax.f32 %v215, 0.0
    %v231 = vmax.f32 %v218, 0.0
    %v232 = vmax.f32 %v220, 0.0
    %v233 = vmax.f32 %v223, 0.0
    %v234 = vmax.f32 %v225, 0.0
    %v235 = vpack.c.bf16 %v228, %v227
    %v236 = vpack.c.bf16 %v230, %v229
    %v237 = vpack.c.bf16 %v232, %v231
    %v238 = vpack.c.bf16 %v234, %v233
    %v239 = vld [vmem:[#allocation2] sm:$0xf]
    %v240 = vld [vmem:[#allocation2 + $0x4] sm:$0xf]
    %v241 = vld [vmem:[#allocation2 + $0x8] sm:$0xf]
    %v242 = vld [vmem:[#allocation2 + $0xc] sm:$0xf]
    %v243 = vld [vmem:[#allocation2 + $0x10] sm:$0xf]
    %v244 = vld [vmem:[#allocation2 + $0x14] sm:$0xf]
    %v245 = vld [vmem:[#allocation2 + $0x18] sm:$0xf]
    %v246 = vld [vmem:[#allocation2 + $0x1c] sm:$0xf]
    %v247 = vld [vmem:[#allocation2 + $0x20] sm:$0xf]
    %v248 = vld [vmem:[#allocation2 + $0x24] sm:$0xf]
    %v249 = vld [vmem:[#allocation2 + $0x28] sm:$0xf]
    %v250 = vld [vmem:[#allocation2 + $0x2c] sm:$0xf]
    %v251 = vld [vmem:[#allocation2 + $0x30] sm:$0xf]
    %v252 = vld [vmem:[#allocation2 + $0x34] sm:$0xf]
    %v253 = vld [vmem:[#allocation2 + $0x38] sm:$0xf]
    %v254 = vld [vmem:[#allocation2 + $0x3c] sm:$0xf]
    %v271 = vunpack.c.l.b16 %v239
    %v272 = vunpack.c.l.b16 %v240
    %v273 = vunpack.c.l.b16 %v241
    %v274 = vunpack.c.l.b16 %v242
    %v275 = vunpack.c.l.b16 %v243
    %v276 = vunpack.c.l.b16 %v244
    %v277 = vunpack.c.l.b16 %v245
    %v278 = vunpack.c.l.b16 %v246
    %v279 = vunpack.c.l.b16 %v247
    %v280 = vunpack.c.l.b16 %v248
    %v281 = vunpack.c.l.b16 %v249
    %v282 = vunpack.c.l.b16 %v250
    %v283 = vunpack.c.l.b16 %v251
    %v284 = vunpack.c.l.b16 %v252
    %v285 = vunpack.c.l.b16 %v253
    %v286 = vunpack.c.l.b16 %v254
    %v287 = vpack.c.b16 %v272, %v271
    %v288 = vpack.c.b16 %v274, %v273
    %v289 = vpack.c.b16 %v276, %v275
    %v290 = vpack.c.b16 %v278, %v277
    %v291 = vpack.c.b16 %v280, %v279
    %v292 = vpack.c.b16 %v282, %v281
    %v293 = vpack.c.b16 %v284, %v283
    %v294 = vpack.c.b16 %v286, %v285
    %303 = vmatpush.bf16.msra.mxu0 %v294
    %304 = vmatpush.bf16.msra.mxu0 %v293
    %305 = vmatpush.bf16.msra.mxu0 %v292
    %306 = vmatpush.bf16.msra.mxu0 %v291
    %307 = vmatpush.bf16.msra.mxu0 %v290
    %308 = vmatpush.bf16.msra.mxu0 %v289
    %309 = vmatpush.bf16.msra.mxu0 %v288
    %310 = vmatpush.bf16.msra.mxu0 %v287
    %311 = vmatmul.bf16.gmra.mxu0 %v235
    %v312 = vpop.f32.mrf.mxu0
    %v313 = vadd.f32 0.0, %v312
    %v314 = vpop.f32.mrf.mxu0
    %v315 = vadd.f32 0.0, %v314
    %316 = vmatmul.bf16.gmra.mxu0 %v236
    %v317 = vpop.f32.mrf.mxu0
    %v318 = vadd.f32 0.0, %v317
    %v319 = vpop.f32.mrf.mxu0
    %v320 = vadd.f32 0.0, %v319
    %321 = vmatmul.bf16.gmra.mxu0 %v237
    %v322 = vpop.f32.mrf.mxu0
    %v323 = vadd.f32 0.0, %v322
    %v324 = vpop.f32.mrf.mxu0
    %v325 = vadd.f32 0.0, %v324
    %326 = vmatmul.bf16.gmra.mxu0 %v238
    %v327 = vpop.f32.mrf.mxu0
    %v328 = vadd.f32 0.0, %v327
    %v329 = vpop.f32.mrf.mxu0
    %v330 = vadd.f32 0.0, %v329
    %331 = vdwg.mxu0
    %v332 = vpack.c.bf16 %v315, %v313
    %v333 = vpack.c.bf16 %v320, %v318
    %v334 = vpack.c.bf16 %v325, %v323
    %v335 = vpack.c.bf16 %v330, %v328
    %v336 = vld [vmem:[%s5] sm:$0x1]
    %v338 = vperm.slane %v336, 0
    %340 = vmatpush.bf16.msra.mxu0 0
    %341 = vmatpush.bf16.msra.mxu0 0
    %342 = vmatpush.bf16.msra.mxu0 0
    %343 = vmatpush.bf16.msra.mxu0 0
    %344 = vmatpush.bf16.msra.mxu0 %v335
    %345 = vmatpush.bf16.msra.mxu0 %v334
    %346 = vmatpush.bf16.msra.mxu0 %v333
    %347 = vmatpush.bf16.msra.mxu0 %v332
    %348 = vmatmul.bf16.gmra.mxu0 %v187
    %v349 = vpop.f32.mrf.mxu0
    %v350 = vadd.f32 %v338, %v349
    %v351 = vpop.f32.mrf.mxu0
    %v352 = vadd.f32 %v338, %v351
    %353 = vmatmul.bf16.gmra.mxu0 %v190
    %v354 = vpop.f32.mrf.mxu0
    %v355 = vadd.f32 %v338, %v354
    %v356 = vpop.f32.mrf.mxu0
    %v357 = vadd.f32 %v338, %v356
    %358 = vmatmul.bf16.gmra.mxu0 %v193
    %v359 = vpop.f32.mrf.mxu0
    %v360 = vadd.f32 %v338, %v359
    %v361 = vpop.f32.mrf.mxu0
    %v362 = vadd.f32 %v338, %v361
    %363 = vmatmul.bf16.gmra.mxu0 %v196
    %v364 = vpop.f32.mrf.mxu0
    %v365 = vadd.f32 %v338, %v364
    %v366 = vpop.f32.mrf.mxu0
    %v367 = vadd.f32 %v338, %v366
    %368 = vdwg.mxu0
    %v369 = vmax.f32 %v350, 0.0
    %v370 = vmax.f32 %v352, 0.0
    %v371 = vmax.f32 %v355, 0.0
    %v372 = vmax.f32 %v357, 0.0
    %v373 = vmax.f32 %v360, 0.0
    %v374 = vmax.f32 %v362, 0.0
    %v375 = vmax.f32 %v365, 0.0
    %v376 = vmax.f32 %v367, 0.0
    %v377 = vpack.c.bf16 %v370, %v369
    %v378 = vpack.c.bf16 %v372, %v371
    %v379 = vpack.c.bf16 %v374, %v373
    %v380 = vpack.c.bf16 %v376, %v375
    %v381 = vld [vmem:[#allocation5] sm:$0xf]
    %v382 = vld [vmem:[#allocation5 + $0x4] sm:$0xf]
    %v383 = vld [vmem:[#allocation5 + $0x8] sm:$0xf]
    %v384 = vld [vmem:[#allocation5 + $0xc] sm:$0xf]
    %v385 = vld [vmem:[#allocation5 + $0x10] sm:$0xf]
    %v386 = vld [vmem:[#allocation5 + $0x14] sm:$0xf]
    %v387 = vld [vmem:[#allocation5 + $0x18] sm:$0xf]
    %v388 = vld [vmem:[#allocation5 + $0x1c] sm:$0xf]
    %v389 = vld [vmem:[#allocation5 + $0x20] sm:$0xf]
    %v390 = vld [vmem:[#allocation5 + $0x24] sm:$0xf]
    %v391 = vld [vmem:[#allocation5 + $0x28] sm:$0xf]
    %v392 = vld [vmem:[#allocation5 + $0x2c] sm:$0xf]
    %v393 = vld [vmem:[#allocation5 + $0x30] sm:$0xf]
    %v394 = vld [vmem:[#allocation5 + $0x34] sm:$0xf]
    %v395 = vld [vmem:[#allocation5 + $0x38] sm:$0xf]
    %v396 = vld [vmem:[#allocation5 + $0x3c] sm:$0xf]
    %v413 = vunpack.c.l.b16 %v381
    %v414 = vunpack.c.l.b16 %v382
    %v415 = vunpack.c.l.b16 %v383
    %v416 = vunpack.c.l.b16 %v384
    %v417 = vunpack.c.l.b16 %v385
    %v418 = vunpack.c.l.b16 %v386
    %v419 = vunpack.c.l.b16 %v387
    %v420 = vunpack.c.l.b16 %v388
    %v421 = vunpack.c.l.b16 %v389
    %v422 = vunpack.c.l.b16 %v390
    %v423 = vunpack.c.l.b16 %v391
    %v424 = vunpack.c.l.b16 %v392
    %v425 = vunpack.c.l.b16 %v393
    %v426 = vunpack.c.l.b16 %v394
    %v427 = vunpack.c.l.b16 %v395
    %v428 = vunpack.c.l.b16 %v396
    %v429 = vpack.c.b16 %v414, %v413
    %v430 = vpack.c.b16 %v416, %v415
    %v431 = vpack.c.b16 %v418, %v417
    %v432 = vpack.c.b16 %v420, %v419
    %v433 = vpack.c.b16 %v422, %v421
    %v434 = vpack.c.b16 %v424, %v423
    %v435 = vpack.c.b16 %v426, %v425
    %v436 = vpack.c.b16 %v428, %v427
    %445 = vmatpush.bf16.msra.mxu0 %v436
    %446 = vmatpush.bf16.msra.mxu0 %v435
    %447 = vmatpush.bf16.msra.mxu0 %v434
    %448 = vmatpush.bf16.msra.mxu0 %v433
    %449 = vmatpush.bf16.msra.mxu0 %v432
    %450 = vmatpush.bf16.msra.mxu0 %v431
    %451 = vmatpush.bf16.msra.mxu0 %v430
    %452 = vmatpush.bf16.msra.mxu0 %v429
    %453 = vmatmul.bf16.gmra.mxu0 %v377
    %v454 = vpop.f32.mrf.mxu0
    %v455 = vadd.f32 0.0, %v454
    %v456 = vpop.f32.mrf.mxu0
    %v457 = vadd.f32 0.0, %v456
    %458 = vmatmul.bf16.gmra.mxu0 %v378
    %v459 = vpop.f32.mrf.mxu0
    %v460 = vadd.f32 0.0, %v459
    %v461 = vpop.f32.mrf.mxu0
    %v462 = vadd.f32 0.0, %v461
    %463 = vmatmul.bf16.gmra.mxu0 %v379
    %v464 = vpop.f32.mrf.mxu0
    %v465 = vadd.f32 0.0, %v464
    %v466 = vpop.f32.mrf.mxu0
    %v467 = vadd.f32 0.0, %v466
    %468 = vmatmul.bf16.gmra.mxu0 %v380
    %v469 = vpop.f32.mrf.mxu0
    %v470 = vadd.f32 0.0, %v469
    %v471 = vpop.f32.mrf.mxu0
    %v472 = vadd.f32 0.0, %v471
    %473 = vdwg.mxu0
    %v474 = vpack.c.bf16 %v457, %v455
    %v475 = vpack.c.bf16 %v462, %v460
    %v476 = vpack.c.bf16 %v467, %v465
    %v477 = vpack.c.bf16 %v472, %v470
    %v478 = vld [vmem:[%s7] sm:$0x1]
    %v480 = vperm.slane %v478, 0
    %482 = vmatpush.bf16.msra.mxu0 0
    %483 = vmatpush.bf16.msra.mxu0 0
    %484 = vmatpush.bf16.msra.mxu0 0
    %485 = vmatpush.bf16.msra.mxu0 0
    %486 = vmatpush.bf16.msra.mxu0 %v477
    %487 = vmatpush.bf16.msra.mxu0 %v476
    %488 = vmatpush.bf16.msra.mxu0 %v475
    %489 = vmatpush.bf16.msra.mxu0 %v474
    %490 = vmatmul.bf16.gmra.mxu0 %v187
    %v491 = vpop.f32.mrf.mxu0
    %v492 = vadd.f32 %v480, %v491
    %v493 = vpop.f32.mrf.mxu0
    %v494 = vadd.f32 %v480, %v493
    %495 = vmatmul.bf16.gmra.mxu0 %v190
    %v496 = vpop.f32.mrf.mxu0
    %v497 = vadd.f32 %v480, %v496
    %v498 = vpop.f32.mrf.mxu0
    %v499 = vadd.f32 %v480, %v498
    %500 = vmatmul.bf16.gmra.mxu0 %v193
    %v501 = vpop.f32.mrf.mxu0
    %v502 = vadd.f32 %v480, %v501
    %v503 = vpop.f32.mrf.mxu0
    %v504 = vadd.f32 %v480, %v503
    %505 = vmatmul.bf16.gmra.mxu0 %v196
    %v506 = vpop.f32.mrf.mxu0
    %v507 = vadd.f32 %v480, %v506
    %v508 = vpop.f32.mrf.mxu0
    %v509 = vadd.f32 %v480, %v508
    %510 = vdwg.mxu0
    %511 = vst [vmem:[#allocation7] sm:$0xff] %v492
    %512 = vst [vmem:[#allocation7 + $0x8] sm:$0xff] %v494
    %513 = vst [vmem:[#allocation7 + $0x10] sm:$0xff] %v497
    %514 = vst [vmem:[#allocation7 + $0x18] sm:$0xff] %v499
    %515 = vst [vmem:[#allocation7 + $0x20] sm:$0xff] %v502
    %516 = vst [vmem:[#allocation7 + $0x28] sm:$0xff] %v504
    %517 = vst [vmem:[#allocation7 + $0x30] sm:$0xff] %v507
    %518 = vst [vmem:[#allocation7 + $0x38] sm:$0xff] %v509
    // Predicated region
    $region42: #{tpu_custom_call.1} parent=1 // pred_check
      _
    $region43: #{tpu_custom_call.1} parent=1 // pred_check_branch
      %520 = sbr.rel (0) target = $region45
    $region44: #{tpu_custom_call.1} parent=1 // pred_region
      %522 = vsyncadd [#allocation4], 0
      %s523 = sshll.u32 [#allocation7], 4
      %s524 = int_to_ptr.vmem [resolvable:$true] %s523
      %s525 = sshll.u32 %s8, 4
      %s526 = int_to_ptr.hbm [resolvable:$true] %s525
      %531 = dma.vmem_to_hbm [thread:$0]  %s524, 1024, %s526, [#allocation4], 128, 128, 8
    $region45: #{tpu_custom_call.1} parent=1 // pred_fallthru
      _
    // Predicated region
    $region46: #{tpu_custom_call.1} parent=1 // pred_check
      _
    $region47: #{tpu_custom_call.1} parent=1 // pred_check_branch
      %533 = sbr.rel (0) target = $region49
    $region48: #{tpu_custom_call.1} parent=1 // pred_region
      %535 = dma.done [#allocation4], 1024
    $region49: #{tpu_custom_call.1} parent=1 // pred_fallthru
      _
    %536 = vsyncpa [#allocation3], 1
    %537 = vsyncpa [#allocation6], 1
    %538 = vsyncpa [#allocation4], 1

</llo_original>
